<compile_context>
chip_gen: v6e
topology: v6e:2x2x1
jax: 0.10.0
libtpu: 0.0.40
codegen_flags: <defaults>
</compile_context>

<pallas_src>
import math

import numpy as np
import jax
import jax.numpy as jnp
from jax.experimental import pallas as pl
from jax.experimental.pallas import tpu as pltpu


# ----------------------------------------------------------------------------
# In-kernel helpers
# ----------------------------------------------------------------------------

_SQRT1_2 = 0.7071067811865476


def _erf_approx(x):
    # Abramowitz & Stegun 7.1.26 polynomial, |err| < 1.5e-7 -> fp32-exact GELU.
    # Exact divide kept (approx reciprocal would eat into the 2e-3 check budget);
    # the exp() already runs on the EUP slot.
    p = 0.3275911
    a1, a2, a3, a4, a5 = 0.254829592, -0.284496736, 1.421413741, -1.453152027, 1.061405429
    sgn = jnp.where(x >= 0.0, 1.0, -1.0)
    ax = jnp.abs(x)
    t = 1.0 / (1.0 + p * ax)
    poly = ((((a5 * t + a4) * t + a3) * t + a2) * t + a1) * t
    return sgn * (1.0 - poly * jnp.exp(-ax * ax))


def _gelu_exact(x):
    # matches torch.nn.GELU() (erf formulation) to ~1e-7
    return 0.5 * x * (1.0 + _erf_approx(x * _SQRT1_2))


def _layer_norm_channels(y, gamma, beta):
    # LayerNorm2d: normalize over the channel (sublane) axis, eps=1e-6, biased var.
    u = jnp.mean(y, axis=0, keepdims=True)
    yc = y - u
    var = jnp.mean(yc * yc, axis=0, keepdims=True)
    return yc * jax.lax.rsqrt(var + 1e-6) * gamma + beta


def _round_up(x, m):
    return ((x + m - 1) // m) * m


# ----------------------------------------------------------------------------
# Pallas kernel 1: sparse prompt embedding (points + box corners, unified)
# ----------------------------------------------------------------------------

def make_sparse_kernel(input_image_size, embed_dim):
    h_in, w_in = input_image_size
    half = embed_dim // 2  # assumes even embed_dim (true for SAM2 configs)

    def kernel(coords_ref, labels_ref, gauss_ref, table_ref, out_ref):
        c = coords_ref[...] + 0.5                       # (M, 2) "+0.5 to center of pixel"
        cx = 2.0 * (c[:, 0:1] * (1.0 / w_in)) - 1.0     # (M, 1)
        cy = 2.0 * (c[:, 1:2] * (1.0 / h_in)) - 1.0
        g = gauss_ref[...]                              # (2, D/2)
        proj = (2.0 * math.pi) * (cx * g[0:1, :] + cy * g[1:2, :])   # (M, D/2)

        lab = labels_ref[...]                           # (M, 1) int32, values in [-1, 3]
        valid = lab != -1

        # label-conditional embedding add as predicated adds (no one-hot MXU matmul):
        # row 0 of table = not_a_point, rows 1..4 = point_embeddings[0..3]
        add = jnp.where(lab == -1, table_ref[0:1, :], 0.0)           # (M, D)
        for k in range(4):
            add = add + jnp.where(lab == k, table_ref[k + 1:k + 2, :], 0.0)

        sin_p = jnp.where(valid, jnp.sin(proj), 0.0)
        cos_p = jnp.where(valid, jnp.cos(proj), 0.0)
        # write directly into the two halves of out_ref (no lane-axis concatenate)
        out_ref[:, :half] = sin_p + add[:, :half]
        out_ref[:, half:] = cos_p + add[:, half:]

    return kernel


def sparse_embed(coords_flat, labels_flat, gauss, table, input_image_size):
    m = coords_flat.shape[0]
    d = table.shape[1]
    kernel = make_sparse_kernel(input_image_size, d)
    return pl.pallas_call(
        kernel,
        out_shape=jax.ShapeDtypeStruct((m, d), jnp.float32),
        grid=(1,),
        in_specs=[
            pl.BlockSpec((m, 2), lambda i: (0, 0)),
            pl.BlockSpec((m, 1), lambda i: (0, 0)),
            pl.BlockSpec((2, d // 2), lambda i: (0, 0)),
            pl.BlockSpec((5, d), lambda i: (0, 0)),
        ],
        out_specs=pl.BlockSpec((m, d), lambda i: (0, 0)),
    )(coords_flat, labels_flat, gauss, table)


# ----------------------------------------------------------------------------
# Pallas kernel 2: fused mask downscaling
#   conv(1->C1,2x2,s2)+LN+GELU -> conv(C1->C2,2x2,s2)+LN+GELU -> conv(C2->D,1x1)
# Layout: channels on sublanes, pixels on lanes.
#   input  x: (16, Npix)  row p = r*4 + c inside the 4x4 input patch of each output pixel
#   output o: (D, Npix)
# ----------------------------------------------------------------------------

def _fused_mask_downscale_kernel(
        x_ref, w1_ref, b1_ref, ln1_g_ref, ln1_b_ref,
        w2_ref, b2_ref, ln2_g_ref, ln2_b_ref,
        w3_ref, b3_ref, out_ref):
    c1 = w1_ref.shape[0]
    x = x_ref[...]                      # (16, TP)
    w1 = w1_ref[...]                    # (C1, 4), tap t = ky*2 + kx
    b1 = b1_ref[...]                    # (C1, 1)
    ln1_g = ln1_g_ref[...]
    ln1_b = ln1_b_ref[...]

    # ---- stage 1: 2x2/s2 conv as unrolled VPU FMAs (K=4 -> skip the MXU), LN, GELU ----
    # One result per stage-1 pixel (a, b) inside the 4x4 patch.
    g1 = []
    for a in range(2):
        for b in range(2):
            acc = None
            for ky in range(2):
                for kx in range(2):
                    t = ky * 2 + kx
                    p = (2 * a + ky) * 4 + (2 * b + kx)
                    term = w1[:, t:t + 1] * x[p:p + 1, :]          # (C1,1)*(1,TP)->(C1,TP)
                    acc = term if acc is None else acc + term
            y = acc + b1
            g1.append(_gelu_exact(_layer_norm_channels(y, ln1_g, ln1_b)))

    # ---- stage 2: 2x2/s2 conv as unrolled VPU FMAs (K = 4*C1), LN, GELU ----
    w2 = w2_ref[...]                    # (C2, 4*C1), column j = (a*2+b)*C1 + c
    b2 = b2_ref[...]                    # (C2, 1)
    acc2 = None
    for q in range(4):
        gq = g1[q]
        for c in range(c1):
            j = q * c1 + c
            term = w2[:, j:j + 1] * gq[c:c + 1, :]                 # (C2,1)*(1,TP)
            acc2 = term if acc2 is None else acc2 + term
    y2 = acc2 + b2
    h2 = _gelu_exact(_layer_norm_channels(y2, ln2_g_ref[...], ln2_b_ref[...]))  # (C2, TP)

    # ---- stage 3: 1x1 conv C2 -> D on the MXU; (D, TP) lane-dense store ----
    out_ref[...] = (
        jnp.dot(w3_ref[...], h2, preferred_element_type=jnp.float32) + b3_ref[...]
    )


def fused_mask_downscale(x_patches, w1, b1, ln1_g, ln1_b, w2, b2, ln2_g, ln2_b,
                         w3, b3, *, pixel_tile):
    k16, npad = x_patches.shape
    c1 = w1.shape[0]
    c2 = w2.shape[0]
    d = w3.shape[0]
    tp = pixel_tile
    grid = (npad // tp,)
    fixed = lambda i: (0, 0)   # weights/bias/LN params stay VMEM-resident across tiles
    return pl.pallas_call(
        _fused_mask_downscale_kernel,
        out_shape=jax.ShapeDtypeStruct((d, npad), jnp.float32),
        grid=grid,
        in_specs=[
            pl.BlockSpec((k16, tp), lambda i: (0, i)),
            pl.BlockSpec((c1, 4), fixed),
            pl.BlockSpec((c1, 1), fixed),
            pl.BlockSpec((c1, 1), fixed),
            pl.BlockSpec((c1, 1), fixed),
            pl.BlockSpec((c2, 4 * c1), fixed),
            pl.BlockSpec((c2, 1), fixed),
            pl.BlockSpec((c2, 1), fixed),
            pl.BlockSpec((c2, 1), fixed),
            pl.BlockSpec((d, c2), fixed),
            pl.BlockSpec((d, 1), fixed),
        ],
        out_specs=pl.BlockSpec((d, tp), lambda i: (0, i)),
        compiler_params=pltpu.CompilerParams(
            dimension_semantics=("parallel",)),
    )(x_patches,
      w1, b1.reshape(c1, 1), ln1_g.reshape(c1, 1), ln1_b.reshape(c1, 1),
      w2, b2.reshape(c2, 1), ln2_g.reshape(c2, 1), ln2_b.reshape(c2, 1),
      w3, b3.reshape(d, 1))


# ----------------------------------------------------------------------------
# Plain-JAX glue (layout only): NCHW mask -> (16, B*He*We) 4x4-patch columns
# ----------------------------------------------------------------------------

def mask_to_patch_columns(masks, he, we):
    b = masks.shape[0]
    x = masks.astype(jnp.float32)[:, 0]                       # (B, 4He, 4We)
    x = x.reshape(b, he, 4, we, 4).transpose(0, 2, 4, 1, 3)   # (B, 4, 4, He, We)
    x = x.reshape(b, 16, he * we).transpose(1, 0, 2)          # (16, B, He*We)
    return x.reshape(16, b * he * we)                         # row p = r*4 + c


# ----------------------------------------------------------------------------
# PromptEncoder
# ----------------------------------------------------------------------------

class PromptEncoderPallas:
    def __init__(self, embed_dim, image_embedding_size, input_image_size, mask_in_chans,
                 key, pixel_tile=256):
        self.embed_dim = embed_dim
        self.image_embedding_size = image_embedding_size
        self.input_image_size = input_image_size
        self.mask_in_chans = mask_in_chans
        self.pixel_tile = pixel_tile  # lane-dense pixel tile; sweep (256..1024) per chip gen
        c1 = mask_in_chans // 4
        d = embed_dim
        ks = jax.random.split(key, 16)

        # PositionEmbeddingRandom(embed_dim // 2): gaussian matrix (2, D/2), scale = 1.0
        self.pe_gaussian = jax.random.normal(ks[0], (2, d // 2), jnp.float32)
        # 4 point embeddings + not_a_point + no_mask (each nn.Embedding(1, D))
        self.point_embeddings = [
            jax.random.normal(ks[1 + i], (1, d), jnp.float32) for i in range(4)
        ]
        self.not_a_point_embed = jax.random.normal(ks[5], (1, d), jnp.float32)
        self.no_mask_embed = jax.random.normal(ks[6], (1, d), jnp.float32)
        # table rows: [not_a_point, pe0, pe1, pe2, pe3]  (indexed by label + 1)
        self.emb_table = jnp.concatenate([self.not_a_point_embed] + self.point_embeddings, axis=0)

        # mask_downscaling parameters (torch layouts)
        self.conv1_w = 0.2 * jax.random.normal(ks[7], (c1, 1, 2, 2), jnp.float32)
        self.conv1_b = 0.1 * jax.random.normal(ks[8], (c1,), jnp.float32)
        self.ln1_g = 1.0 + 0.1 * jax.random.normal(ks[9], (c1,), jnp.float32)
        self.ln1_b = 0.1 * jax.random.normal(ks[10], (c1,), jnp.float32)
        self.conv2_w = 0.2 * jax.random.normal(ks[11], (mask_in_chans, c1, 2, 2), jnp.float32)
        self.conv2_b = 0.1 * jax.random.normal(ks[12], (mask_in_chans,), jnp.float32)
        self.ln2_g = 1.0 + 0.1 * jax.random.normal(ks[13], (mask_in_chans,), jnp.float32)
        self.ln2_b = 0.1 * jax.random.normal(ks[14], (mask_in_chans,), jnp.float32)
        self.conv3_w = 0.2 * jax.random.normal(ks[15], (d, mask_in_chans, 1, 1), jnp.float32)
        self.conv3_b = jnp.zeros((d,), jnp.float32)

        # matrix-form weights for the fused kernel (computed once)
        self._w1_mat = self.conv1_w.reshape(c1, 4)                                   # col = ky*2+kx
        self._w2_mat = jnp.transpose(self.conv2_w, (0, 2, 3, 1)).reshape(
            mask_in_chans, 4 * c1)                                                   # col = (a*2+b)*C1+c
        self._w3_mat = self.conv3_w.reshape(d, mask_in_chans)                        # (D, C2)

    # TODO(synk): get_dense_pe() (PositionEmbeddingRandom on a dense grid) is not part of
    # forward(); omitted here.

    def _get_batch_size(self, points, boxes, masks):
        if points is not None:
            return points[0].shape[0]
        if boxes is not None:
            return boxes.shape[0]
        if masks is not None:
            return masks.shape[0]
        return 1

    def __call__(self, points, boxes, masks):
        bs = self._get_batch_size(points, boxes, masks)
        d = self.embed_dim
        he, we = self.image_embedding_size

        # ----- sparse embeddings (points + box corners) -----
        coords_list, labels_list = [], []
        if points is not None:
            coords, labels = points
            coords = coords.astype(jnp.float32)
            labels = labels.astype(jnp.int32)
            if boxes is None:  # pad with a "not a point"
                coords = jnp.concatenate([coords, jnp.zeros((bs, 1, 2), jnp.float32)], axis=1)
                labels = jnp.concatenate([labels, -jnp.ones((bs, 1), jnp.int32)], axis=1)
            coords_list.append(coords)
            labels_list.append(labels)
        if boxes is not None:
            bc = boxes.astype(jnp.float32).reshape(bs, 2, 2)
            bl = jnp.broadcast_to(jnp.array([[2, 3]], jnp.int32), (bs, 2))
            coords_list.append(bc)
            labels_list.append(bl)

        if coords_list:
            coords_all = jnp.concatenate(coords_list, axis=1)
            labels_all = jnp.concatenate(labels_list, axis=1)
            n = coords_all.shape[1]
            sparse = sparse_embed(
                coords_all.reshape(bs * n, 2),
                labels_all.reshape(bs * n, 1),
                self.pe_gaussian,
                self.emb_table,
                self.input_image_size,
            ).reshape(bs, n, d)
        else:
            sparse = jnp.zeros((bs, 0, d), jnp.float32)

        # ----- dense embeddings (fused mask downscaling) -----
        if masks is not None:
            b = masks.shape[0]
            x = mask_to_patch_columns(masks, he, we)         # (16, B*He*We)
            ntot = b * he * we
            tp = min(self.pixel_tile, _round_up(ntot, 128))
            npad = _round_up(ntot, tp)
            if npad != ntot:
                x = jnp.pad(x, ((0, 0), (0, npad - ntot)))
            out = fused_mask_downscale(
                x,
                self._w1_mat, self.conv1_b, self.ln1_g, self.ln1_b,
                self._w2_mat, self.conv2_b, self.ln2_g, self.ln2_b,
                self._w3_mat, self.conv3_b,
                pixel_tile=tp,
            )                                                # (D, npad)
            out = out[:, :ntot].reshape(d, b, he, we)
            dense = jnp.transpose(out, (1, 0, 2, 3))         # (B, D, He, We)
        else:
            dense = jnp.broadcast_to(self.no_mask_embed.reshape(1, d, 1, 1), (bs, d, he, we))

        return sparse, dense


# ----------------------------------------------------------------------------
# Pure-JAX reference (for correctness check only)
# ----------------------------------------------------------------------------

def reference_forward(enc, points, boxes, masks):
    d = enc.embed_dim
    h_in, w_in = enc.input_image_size
    he, we = enc.image_embedding_size
    bs = enc._get_batch_size(points, boxes, masks)

    def pe_with_coords(coords):  # coords already +0.5, raw pixel units
        cx = coords[..., 0] / w_in
        cy = coords[..., 1] / h_in
        c = jnp.stack([cx, cy], axis=-1)
        c = 2.0 * c - 1.0
        proj = 2.0 * np.pi * (c @ enc.pe_gaussian)
        return jnp.concatenate([jnp.sin(proj), jnp.cos(proj)], axis=-1)

    parts = []
    if points is not None:
        coords, labels = points
        coords = coords.astype(jnp.float32)
        labels = labels.astype(jnp.int32)
        if boxes is None:
            coords = jnp.concatenate([coords, jnp.zeros((bs, 1, 2), jnp.float32)], axis=1)
            labels = jnp.concatenate([labels, -jnp.ones((bs, 1), jnp.int32)], axis=1)
        pe = pe_with_coords(coords + 0.5)
        pe = jnp.where((labels == -1)[..., None], 0.0, pe)
        pe = pe + jnp.where((labels == -1)[..., None], enc.not_a_point_embed[0], 0.0)
        for k in range(4):
            pe = pe + jnp.where((labels == k)[..., None], enc.point_embeddings[k][0], 0.0)
        parts.append(pe)
    if boxes is not None:
        bc = boxes.astype(jnp.float32).reshape(bs, 2, 2) + 0.5
        ce = pe_with_coords(bc)
        ce = ce.at[:, 0, :].add(enc.point_embeddings[2][0])
        ce = ce.at[:, 1, :].add(enc.point_embeddings[3][0])
        parts.append(ce)
    sparse = jnp.concatenate(parts, axis=1) if parts else jnp.zeros((bs, 0, d), jnp.float32)

    if masks is not None:
        def conv(x, w, b, s):
            y = jax.lax.conv_general_dilated(
                x, w, (s, s), "VALID", dimension_numbers=("NCHW", "OIHW", "NCHW"))
            return y + b.reshape(1, -1, 1, 1)

        def ln2d(x, g, bta):
            u = x.mean(axis=1, keepdims=True)
            v = ((x - u) ** 2).mean(axis=1, keepdims=True)
            return (x - u) / jnp.sqrt(v + 1e-6) * g.reshape(1, -1, 1, 1) + bta.reshape(1, -1, 1, 1)

        h = conv(masks.astype(jnp.float32), enc.conv1_w, enc.conv1_b, 2)
        h = jax.nn.gelu(ln2d(h, enc.ln1_g, enc.ln1_b), approximate=False)
        h = conv(h, enc.conv2_w, enc.conv2_b, 2)
        h = jax.nn.gelu(ln2d(h, enc.ln2_g, enc.ln2_b), approximate=False)
        dense = conv(h, enc.conv3_w, enc.conv3_b, 1)
    else:
        dense = jnp.broadcast_to(enc.no_mask_embed.reshape(1, d, 1, 1), (bs, d, he, we))
    return sparse, dense


# ----------------------------------------------------------------------------
# Main
# ----------------------------------------------------------------------------

if __name__ == "__main__":
    key = jax.random.PRNGKey(0)
    k_param, k_pts, k_lbl, k_box, k_mask = jax.random.split(key, 5)

    embed_dim = 32
    mask_in_chans = 16
    image_embedding_size = (16, 16)       # mask input = 64 x 64, dense output = 16 x 16
    input_image_size = (64, 64)

    enc = PromptEncoderPallas(embed_dim, image_embedding_size, input_image_size,
                              mask_in_chans, k_param, pixel_tile=256)

    B, Np = 2, 3
    coords = jax.random.uniform(k_pts, (B, Np, 2), jnp.float32, 0.0, 64.0)
    labels = jax.random.randint(k_lbl, (B, Np), 0, 2).astype(jnp.int32)
    boxes = jax.random.uniform(k_box, (B, 4), jnp.float32, 0.0, 64.0)
    masks = jax.random.normal(
        k_mask, (B, 1, 4 * image_embedding_size[0], 4 * image_embedding_size[1]), jnp.float32)

    # case 1: points + boxes + masks
    sparse, dense = enc((coords, labels), boxes, masks)
    jax.block_until_ready((sparse, dense))
    assert sparse.shape == (B, Np + 2, embed_dim)
    assert dense.shape == (B, embed_dim, *image_embedding_size)
    ref_sparse, ref_dense = reference_forward(enc, (coords, labels), boxes, masks)
    assert np.allclose(np.asarray(sparse), np.asarray(ref_sparse), atol=2e-3, rtol=2e-3)
    assert np.allclose(np.asarray(dense), np.asarray(ref_dense), atol=2e-3, rtol=2e-3)

    # case 2: points only (exercises padding point / label == -1 path and no_mask dense)
    sparse2, dense2 = enc((coords, labels), None, None)
    jax.block_until_ready((sparse2, dense2))
    assert sparse2.shape == (B, Np + 1, embed_dim)
    assert dense2.shape == (B, embed_dim, *image_embedding_size)
    ref_sparse2, ref_dense2 = reference_forward(enc, (coords, labels), None, None)
    assert np.allclose(np.asarray(sparse2), np.asarray(ref_sparse2), atol=2e-3, rtol=2e-3)
    assert np.allclose(np.asarray(dense2), np.asarray(ref_dense2), atol=2e-3, rtol=2e-3)

    print("KERNEL_OK")
</pallas_src>

<mosaic_0001>
module attributes {stable_mosaic.version = 11 : i64} {
  func.func @kernel(%arg0: i32, %arg1: memref<10x2xf32, #tpu.memory_space<vmem>>, %arg2: memref<10x1xi32, #tpu.memory_space<vmem>>, %arg3: memref<2x16xf32, #tpu.memory_space<vmem>>, %arg4: memref<5x32xf32, #tpu.memory_space<vmem>>, %arg5: memref<10x32xf32, #tpu.memory_space<vmem>>) attributes {dimension_semantics = [#tpu.dimension_semantics<arbitrary>], iteration_bounds = array<i64: 1>, scalar_prefetch = 0 : i64, scratch_operands = 0 : i64, tpu.core_type = #tpu.core_type<tc>, window_params = [{pipeline_mode = #tpu.pipeline_mode<synchronous>, transform_indices = @transform_0, window_bounds = array<i64: 10, 2>}, {pipeline_mode = #tpu.pipeline_mode<synchronous>, transform_indices = @transform_1, window_bounds = array<i64: 10, 1>}, {pipeline_mode = #tpu.pipeline_mode<synchronous>, transform_indices = @transform_2, window_bounds = array<i64: 2, 16>}, {pipeline_mode = #tpu.pipeline_mode<synchronous>, transform_indices = @transform_3, window_bounds = array<i64: 5, 32>}, {pipeline_mode = #tpu.pipeline_mode<synchronous>, transform_indices = @transform_4, window_bounds = array<i64: 10, 32>}]} {
    %c0 = arith.constant 0 : index
    %c0_0 = arith.constant 0 : index
    %0 = vector.load %arg1[%c0, %c0_0] : memref<10x2xf32, #tpu.memory_space<vmem>>, vector<10x2xf32>
    %cst = arith.constant 5.000000e-01 : f32
    %1 = vector.broadcast %cst : f32 to vector<10x2xf32>
    %2 = arith.addf %0, %1 : vector<10x2xf32>
    %3 = vector.extract_strided_slice %2 {offsets = [0, 0], sizes = [10, 1], strides = [1, 1]} : vector<10x2xf32> to vector<10x1xf32>
    %cst_1 = arith.constant 1.562500e-02 : f32
    %4 = vector.broadcast %cst_1 : f32 to vector<10x1xf32>
    %5 = arith.mulf %3, %4 : vector<10x1xf32>
    %cst_2 = arith.constant 2.000000e+00 : f32
    %6 = vector.broadcast %cst_2 : f32 to vector<10x1xf32>
    %7 = arith.mulf %6, %5 : vector<10x1xf32>
    %cst_3 = arith.constant 1.000000e+00 : f32
    %8 = vector.broadcast %cst_3 : f32 to vector<10x1xf32>
    %9 = arith.subf %7, %8 : vector<10x1xf32>
    %10 = vector.extract_strided_slice %2 {offsets = [0, 1], sizes = [10, 1], strides = [1, 1]} : vector<10x2xf32> to vector<10x1xf32>
    %cst_4 = arith.constant 1.562500e-02 : f32
    %11 = vector.broadcast %cst_4 : f32 to vector<10x1xf32>
    %12 = arith.mulf %10, %11 : vector<10x1xf32>
    %cst_5 = arith.constant 2.000000e+00 : f32
    %13 = vector.broadcast %cst_5 : f32 to vector<10x1xf32>
    %14 = arith.mulf %13, %12 : vector<10x1xf32>
    %cst_6 = arith.constant 1.000000e+00 : f32
    %15 = vector.broadcast %cst_6 : f32 to vector<10x1xf32>
    %16 = arith.subf %14, %15 : vector<10x1xf32>
    %c0_7 = arith.constant 0 : index
    %c0_8 = arith.constant 0 : index
    %17 = vector.load %arg3[%c0_7, %c0_8] : memref<2x16xf32, #tpu.memory_space<vmem>>, vector<2x16xf32>
    %18 = vector.extract_strided_slice %17 {offsets = [0, 0], sizes = [1, 16], strides = [1, 1]} : vector<2x16xf32> to vector<1x16xf32>
    %19 = vector.broadcast %9 : vector<10x1xf32> to vector<10x16xf32>
    %20 = vector.broadcast %18 : vector<1x16xf32> to vector<10x16xf32>
    %21 = arith.mulf %19, %20 : vector<10x16xf32>
    %22 = vector.extract_strided_slice %17 {offsets = [1, 0], sizes = [1, 16], strides = [1, 1]} : vector<2x16xf32> to vector<1x16xf32>
    %23 = vector.broadcast %16 : vector<10x1xf32> to vector<10x16xf32>
    %24 = vector.broadcast %22 : vector<1x16xf32> to vector<10x16xf32>
    %25 = arith.mulf %23, %24 : vector<10x16xf32>
    %26 = arith.addf %21, %25 : vector<10x16xf32>
    %cst_9 = arith.constant 6.28318548 : f32
    %27 = vector.broadcast %cst_9 : f32 to vector<10x16xf32>
    %28 = arith.mulf %27, %26 : vector<10x16xf32>
    %c0_10 = arith.constant 0 : index
    %c0_11 = arith.constant 0 : index
    %29 = vector.load %arg2[%c0_10, %c0_11] : memref<10x1xi32, #tpu.memory_space<vmem>>, vector<10x1xi32>
    %c-1_i32 = arith.constant -1 : i32
    %30 = vector.broadcast %c-1_i32 : i32 to vector<10x1xi32>
    %31 = arith.cmpi ne, %29, %30 : vector<10x1xi32>
    %c-1_i32_12 = arith.constant -1 : i32
    %32 = vector.broadcast %c-1_i32_12 : i32 to vector<10x1xi32>
    %33 = arith.cmpi eq, %29, %32 : vector<10x1xi32>
    %c0_13 = arith.constant 0 : index
    %c0_14 = arith.constant 0 : index
    %34 = vector.load %arg4[%c0_13, %c0_14] : memref<5x32xf32, #tpu.memory_space<vmem>>, vector<1x32xf32>
    %cst_15 = arith.constant 0.000000e+00 : f32
    %35 = vector.shape_cast %33 : vector<10x1xi1> to vector<10x1xi1>
    %36 = vector.broadcast %35 : vector<10x1xi1> to vector<10x32xi1>
    %37 = vector.shape_cast %34 : vector<1x32xf32> to vector<1x32xf32>
    %38 = vector.broadcast %37 : vector<1x32xf32> to vector<10x32xf32>
    %39 = vector.broadcast %cst_15 : f32 to vector<10x32xf32>
    %40 = arith.select %36, %38, %39 : vector<10x32xi1>, vector<10x32xf32>
    %c0_i32 = arith.constant 0 : i32
    %41 = vector.broadcast %c0_i32 : i32 to vector<10x1xi32>
    %42 = arith.cmpi eq, %29, %41 : vector<10x1xi32>
    %c1 = arith.constant 1 : index
    %c0_16 = arith.constant 0 : index
    %43 = vector.load %arg4[%c1, %c0_16] : memref<5x32xf32, #tpu.memory_space<vmem>>, vector<1x32xf32>
    %cst_17 = arith.constant 0.000000e+00 : f32
    %44 = vector.shape_cast %42 : vector<10x1xi1> to vector<10x1xi1>
    %45 = vector.broadcast %44 : vector<10x1xi1> to vector<10x32xi1>
    %46 = vector.shape_cast %43 : vector<1x32xf32> to vector<1x32xf32>
    %47 = vector.broadcast %46 : vector<1x32xf32> to vector<10x32xf32>
    %48 = vector.broadcast %cst_17 : f32 to vector<10x32xf32>
    %49 = arith.select %45, %47, %48 : vector<10x32xi1>, vector<10x32xf32>
    %50 = arith.addf %40, %49 : vector<10x32xf32>
    %c1_i32 = arith.constant 1 : i32
    %51 = vector.broadcast %c1_i32 : i32 to vector<10x1xi32>
    %52 = arith.cmpi eq, %29, %51 : vector<10x1xi32>
    %c2 = arith.constant 2 : index
    %c0_18 = arith.constant 0 : index
    %53 = vector.load %arg4[%c2, %c0_18] : memref<5x32xf32, #tpu.memory_space<vmem>>, vector<1x32xf32>
    %cst_19 = arith.constant 0.000000e+00 : f32
    %54 = vector.shape_cast %52 : vector<10x1xi1> to vector<10x1xi1>
    %55 = vector.broadcast %54 : vector<10x1xi1> to vector<10x32xi1>
    %56 = vector.shape_cast %53 : vector<1x32xf32> to vector<1x32xf32>
    %57 = vector.broadcast %56 : vector<1x32xf32> to vector<10x32xf32>
    %58 = vector.broadcast %cst_19 : f32 to vector<10x32xf32>
    %59 = arith.select %55, %57, %58 : vector<10x32xi1>, vector<10x32xf32>
    %60 = arith.addf %50, %59 : vector<10x32xf32>
    %c2_i32 = arith.constant 2 : i32
    %61 = vector.broadcast %c2_i32 : i32 to vector<10x1xi32>
    %62 = arith.cmpi eq, %29, %61 : vector<10x1xi32>
    %c3 = arith.constant 3 : index
    %c0_20 = arith.constant 0 : index
    %63 = vector.load %arg4[%c3, %c0_20] : memref<5x32xf32, #tpu.memory_space<vmem>>, vector<1x32xf32>
    %cst_21 = arith.constant 0.000000e+00 : f32
    %64 = vector.shape_cast %62 : vector<10x1xi1> to vector<10x1xi1>
    %65 = vector.broadcast %64 : vector<10x1xi1> to vector<10x32xi1>
    %66 = vector.shape_cast %63 : vector<1x32xf32> to vector<1x32xf32>
    %67 = vector.broadcast %66 : vector<1x32xf32> to vector<10x32xf32>
    %68 = vector.broadcast %cst_21 : f32 to vector<10x32xf32>
    %69 = arith.select %65, %67, %68 : vector<10x32xi1>, vector<10x32xf32>
    %70 = arith.addf %60, %69 : vector<10x32xf32>
    %c3_i32 = arith.constant 3 : i32
    %71 = vector.broadcast %c3_i32 : i32 to vector<10x1xi32>
    %72 = arith.cmpi eq, %29, %71 : vector<10x1xi32>
    %c4 = arith.constant 4 : index
    %c0_22 = arith.constant 0 : index
    %73 = vector.load %arg4[%c4, %c0_22] : memref<5x32xf32, #tpu.memory_space<vmem>>, vector<1x32xf32>
    %cst_23 = arith.constant 0.000000e+00 : f32
    %74 = vector.shape_cast %72 : vector<10x1xi1> to vector<10x1xi1>
    %75 = vector.broadcast %74 : vector<10x1xi1> to vector<10x32xi1>
    %76 = vector.shape_cast %73 : vector<1x32xf32> to vector<1x32xf32>
    %77 = vector.broadcast %76 : vector<1x32xf32> to vector<10x32xf32>
    %78 = vector.broadcast %cst_23 : f32 to vector<10x32xf32>
    %79 = arith.select %75, %77, %78 : vector<10x32xi1>, vector<10x32xf32>
    %80 = arith.addf %70, %79 : vector<10x32xf32>
    %81 = math.sin %28 : vector<10x16xf32>
    %cst_24 = arith.constant 0.000000e+00 : f32
    %82 = vector.shape_cast %31 : vector<10x1xi1> to vector<10x1xi1>
    %83 = vector.broadcast %82 : vector<10x1xi1> to vector<10x16xi1>
    %84 = vector.broadcast %cst_24 : f32 to vector<10x16xf32>
    %85 = arith.select %83, %81, %84 : vector<10x16xi1>, vector<10x16xf32>
    %86 = math.cos %28 : vector<10x16xf32>
    %cst_25 = arith.constant 0.000000e+00 : f32
    %87 = vector.shape_cast %31 : vector<10x1xi1> to vector<10x1xi1>
    %88 = vector.broadcast %87 : vector<10x1xi1> to vector<10x16xi1>
    %89 = vector.broadcast %cst_25 : f32 to vector<10x16xf32>
    %90 = arith.select %88, %86, %89 : vector<10x16xi1>, vector<10x16xf32>
    %91 = vector.extract_strided_slice %80 {offsets = [0, 0], sizes = [10, 16], strides = [1, 1]} : vector<10x32xf32> to vector<10x16xf32>
    %92 = arith.addf %85, %91 : vector<10x16xf32>
    %c0_26 = arith.constant 0 : index
    %c0_27 = arith.constant 0 : index
    %93 = vector.load %arg5[%c0_26, %c0_27] : memref<10x32xf32, #tpu.memory_space<vmem>>, vector<10x16xf32>
    tpu.vector_store %arg5[%c0_26, %c0_27], %92 {strides = array<i32>} : memref<10x32xf32, #tpu.memory_space<vmem>>, vector<10x16xf32>,
    %94 = vector.extract_strided_slice %80 {offsets = [0, 16], sizes = [10, 16], strides = [1, 1]} : vector<10x32xf32> to vector<10x16xf32>
    %95 = arith.addf %90, %94 : vector<10x16xf32>
    %c0_28 = arith.constant 0 : index
    %c16 = arith.constant 16 : index
    %96 = vector.load %arg5[%c0_28, %c16] : memref<10x32xf32, #tpu.memory_space<vmem>>, vector<10x16xf32>
    tpu.vector_store %arg5[%c0_28, %c16], %95 {strides = array<i32>} : memref<10x32xf32, #tpu.memory_space<vmem>>, vector<10x16xf32>,
    return
  }
  func.func @transform_0(%arg0: i32) -> (i32, i32) {
    %c0_i32 = arith.constant 0 : i32
    %c0_i32_0 = arith.constant 0 : i32
    %c0_i32_1 = arith.constant 0 : i32
    return %c0_i32, %c0_i32_0 : i32, i32
  }
  func.func @transform_1(%arg0: i32) -> (i32, i32) {
    %c0_i32 = arith.constant 0 : i32
    %c0_i32_0 = arith.constant 0 : i32
    %c0_i32_1 = arith.constant 0 : i32
    return %c0_i32, %c0_i32_0 : i32, i32
  }
  func.func @transform_2(%arg0: i32) -> (i32, i32) {
    %c0_i32 = arith.constant 0 : i32
    %c0_i32_0 = arith.constant 0 : i32
    %c0_i32_1 = arith.constant 0 : i32
    return %c0_i32, %c0_i32_0 : i32, i32
  }
  func.func @transform_3(%arg0: i32) -> (i32, i32) {
    %c0_i32 = arith.constant 0 : i32
    %c0_i32_0 = arith.constant 0 : i32
    %c0_i32_1 = arith.constant 0 : i32
    return %c0_i32, %c0_i32_0 : i32, i32
  }
  func.func @transform_4(%arg0: i32) -> (i32, i32) {
    %c0_i32 = arith.constant 0 : i32
    %c0_i32_0 = arith.constant 0 : i32
    %c0_i32_1 = arith.constant 0 : i32
    return %c0_i32, %c0_i32_0 : i32, i32
  }
}

</mosaic_0001>

<llo_original>
// kernel: tpu_custom_call.1
$region0: #{tpu_custom_call.1}
  #allocation0 [shape = 'u32[]', space=smem, size = 0x4, offset = 0x4, fixed_abs, tag = 'smem constant byte address 0x4 - core index']
  #allocation1 [shape = 'u32[144,128]{1,0:T(1,128)}', space=vmem, size = 0x12000, scoped, tag = 'internal scratch']
  %s0 = inlined_call_operand.vmem [shape: f32[10,2], index: 0, kind: input, shape index: {}]
  %s1 = inlined_call_operand.vmem [shape: s32[10,1], index: 1, kind: input, shape index: {}]
  %s2 = inlined_call_operand.vmem [shape: f32[2,16], index: 2, kind: input, shape index: {}]
  %s3 = inlined_call_operand.vmem [shape: f32[5,32], index: 3, kind: input, shape index: {}]
  %s4 = inlined_call_operand.hbm [shape: f32[10,32], index: 4, kind: output, shape index: {}]
  %s5 = sld [smem:[#allocation0]]
  $region26: #{tpu_custom_call.1} parent=0
    _
  %s7 = ssub.s32 1, %s5
  %s8 = scalar_select 0, %s7, %s5
  $region1: #{tpu_custom_call.1} parent=0
    #allocation2 [shape = 'u8[8192]{0}', space=vmem, size = 0x2000, scoped, tag = 'output window, operand 0, single buffered']
    #allocation3 [shape = 's32[1]{0}', space=sflag, size = 0x4, scoped, tag = 'scoped memory for tpu_custom_call.1']
    %9 = vsyncpa [#allocation3], 0
    // Predicated region
    $region2: #{tpu_custom_call.1} parent=1 // pred_check
      _
    $region3: #{tpu_custom_call.1} parent=1 // pred_check_branch
      %11 = sbr.rel (0) target = $region5
    $region4: #{tpu_custom_call.1} parent=1 // pred_region
      _
    $region5: #{tpu_custom_call.1} parent=1 // pred_fallthru
      _
    // Predicated region
    $region6: #{tpu_custom_call.1} parent=1 // pred_check
      _
    $region7: #{tpu_custom_call.1} parent=1 // pred_check_branch
      %13 = sbr.rel (0) target = $region9
    $region8: #{tpu_custom_call.1} parent=1 // pred_region
      _
    $region9: #{tpu_custom_call.1} parent=1 // pred_fallthru
      _
    // Predicated region
    $region10: #{tpu_custom_call.1} parent=1 // pred_check
      _
    $region11: #{tpu_custom_call.1} parent=1 // pred_check_branch
      %15 = sbr.rel (0) target = $region13
    $region12: #{tpu_custom_call.1} parent=1 // pred_region
      _
    $region13: #{tpu_custom_call.1} parent=1 // pred_fallthru
      _
    // Predicated region
    $region14: #{tpu_custom_call.1} parent=1 // pred_check
      _
    $region15: #{tpu_custom_call.1} parent=1 // pred_check_branch
      %17 = sbr.rel (0) target = $region17
    $region16: #{tpu_custom_call.1} parent=1 // pred_region
      _
    $region17: #{tpu_custom_call.1} parent=1 // pred_fallthru
      _
    %v18 = vld [vmem:[%s0] sm:$0xff]
    %v19 = vld [vmem:[%s0 + $0x8] sm:$0x3]
    %v20 = vadd.f32 %v18, 0.5
    %v21 = vadd.f32 %v19, 0.5
    %v22 = vmul.f32 %v20, 0.015625
    %v23 = vmul.f32 %v21, 0.015625
    %v24 = vmul.f32 %v22, 2.0
    %v25 = vmul.f32 %v23, 2.0
    %v26 = vsub.f32 %v24, 1.0
    %v27 = vsub.f32 %v25, 1.0
    %v28 = vld [vmem:[%s2] sm:$0x3]
    %30 = vset.pattern.permute.xlu0 0
    %31 = vperm.xlu0 %30, %v26
    %v32 = vpop.permute.xlu0 %31
    %35 = vset.pattern.permute.xlu0 0
    %36 = vperm.xlu0 %35, %v27
    %v37 = vpop.permute.xlu0 %36
    %v39 = vlaneseq
    %v40 = vshrl.u32 %v39, 7
    %v41 = vsub.s32 0, %v40
    %v42 = vrot.slane %v28, %v41
    %v43 = vmul.f32 %v32, %v42
    %v44 = vmul.f32 %v37, %v42
    %45 = vset.pattern.permute.xlu0 1
    %46 = vperm.xlu0 %45, %v26
    %v47 = vpop.permute.xlu0 %46
    %49 = vset.pattern.permute.xlu0 1
    %50 = vperm.xlu0 %49, %v27
    %v51 = vpop.permute.xlu0 %50
    %v53 = vlaneseq
    %v54 = vshrl.u32 %v53, 7
    %v55 = vsub.s32 1, %v54
    %v56 = vrot.slane %v28, %v55
    %v57 = vmul.f32 %v47, %v56
    %v58 = vmul.f32 %v51, %v56
    %v59 = vadd.f32 %v43, %v57
    %v60 = vadd.f32 %v44, %v58
    %v61 = vmul.f32 %v59, 6.2831855
    %v62 = vmul.f32 %v60, 6.2831855
    %v63 = vld [vmem:[%s1] sm:$0xff]
    %v64 = vld [vmem:[%s1 + $0x8] sm:$0x3]
    %vm65 = vcmp.ne.s32.totalorder %v63, 4294967295
    %vm66 = vcmp.ne.s32.totalorder %v64, 4294967295
    %vm67 = vcmp.eq.s32.totalorder %v63, 4294967295
    %vm68 = vcmp.eq.s32.totalorder %v64, 4294967295
    %v69 = vld [vmem:[%s3] sm:$0x1]
    %v70 = vsel %vm67, 1, 0
    %v71 = vsel %vm68, 1, 0
    %72 = vset.pattern.permute.xlu0 0
    %73 = vperm.xlu0 %72, %v70
    %v74 = vpop.permute.xlu0 %73
    %75 = vset.pattern.permute.xlu0 0
    %76 = vperm.xlu0 %75, %v71
    %v77 = vpop.permute.xlu0 %76
    %vm78 = vcmp.eq.s32.totalorder %v74, 1
    %vm79 = vcmp.eq.s32.totalorder %v77, 1
    %v80 = vlaneseq
    %v81 = vshrl.u32 %v80, 7
    %v82 = vsub.s32 0, %v81
    %v83 = vrot.slane %v69, %v82
    %v84 = vsel %vm78, %v83, 0.0
    %v85 = vsel %vm79, %v83, 0.0
    %vm86 = vcmp.eq.s32.totalorder %v63, 0
    %vm87 = vcmp.eq.s32.totalorder %v64, 0
    %v88 = vld [vmem:[%s3 + $0x1] sm:$0x1]
    %v89 = vsel %vm86, 1, 0
    %v90 = vsel %vm87, 1, 0
    %91 = vset.pattern.permute.xlu0 0
    %92 = vperm.xlu0 %91, %v89
    %v93 = vpop.permute.xlu0 %92
    %94 = vset.pattern.permute.xlu0 0
    %95 = vperm.xlu0 %94, %v90
    %v96 = vpop.permute.xlu0 %95
    %vm97 = vcmp.eq.s32.totalorder %v93, 1
    %vm98 = vcmp.eq.s32.totalorder %v96, 1
    %v99 = vlaneseq
    %v100 = vshrl.u32 %v99, 7
    %v101 = vsub.s32 0, %v100
    %v102 = vrot.slane %v88, %v101
    %v103 = vsel %vm97, %v102, 0.0
    %v104 = vsel %vm98, %v102, 0.0
    %v105 = vadd.f32 %v84, %v103
    %v106 = vadd.f32 %v85, %v104
    %vm107 = vcmp.eq.s32.totalorder %v63, 1
    %vm108 = vcmp.eq.s32.totalorder %v64, 1
    %v109 = vld [vmem:[%s3 + $0x2] sm:$0x1]
    %v110 = vsel %vm107, 1, 0
    %v111 = vsel %vm108, 1, 0
    %112 = vset.pattern.permute.xlu0 0
    %113 = vperm.xlu0 %112, %v110
    %v114 = vpop.permute.xlu0 %113
    %115 = vset.pattern.permute.xlu0 0
    %116 = vperm.xlu0 %115, %v111
    %v117 = vpop.permute.xlu0 %116
    %vm118 = vcmp.eq.s32.totalorder %v114, 1
    %vm119 = vcmp.eq.s32.totalorder %v117, 1
    %v120 = vlaneseq
    %v121 = vshrl.u32 %v120, 7
    %v122 = vsub.s32 0, %v121
    %v123 = vrot.slane %v109, %v122
    %v124 = vsel %vm118, %v123, 0.0
    %v125 = vsel %vm119, %v123, 0.0
    %v126 = vadd.f32 %v105, %v124
    %v127 = vadd.f32 %v106, %v125
    %vm128 = vcmp.eq.s32.totalorder %v63, 2
    %vm129 = vcmp.eq.s32.totalorder %v64, 2
    %v130 = vld [vmem:[%s3 + $0x3] sm:$0x1]
    %v131 = vsel %vm128, 1, 0
    %v132 = vsel %vm129, 1, 0
    %133 = vset.pattern.permute.xlu0 0
    %134 = vperm.xlu0 %133, %v131
    %v135 = vpop.permute.xlu0 %134
    %136 = vset.pattern.permute.xlu0 0
    %137 = vperm.xlu0 %136, %v132
    %v138 = vpop.permute.xlu0 %137
    %vm139 = vcmp.eq.s32.totalorder %v135, 1
    %vm140 = vcmp.eq.s32.totalorder %v138, 1
    %v141 = vlaneseq
    %v142 = vshrl.u32 %v141, 7
    %v143 = vsub.s32 0, %v142
    %v144 = vrot.slane %v130, %v143
    %v145 = vsel %vm139, %v144, 0.0
    %v146 = vsel %vm140, %v144, 0.0
    %v147 = vadd.f32 %v126, %v145
    %v148 = vadd.f32 %v127, %v146
    %vm149 = vcmp.eq.s32.totalorder %v63, 3
    %vm150 = vcmp.eq.s32.totalorder %v64, 3
    %v151 = vld [vmem:[%s3 + $0x4] sm:$0x1]
    %v152 = vsel %vm149, 1, 0
    %v153 = vsel %vm150, 1, 0
    %154 = vset.pattern.permute.xlu0 0
    %155 = vperm.xlu0 %154, %v152
    %v156 = vpop.permute.xlu0 %155
    %157 = vset.pattern.permute.xlu0 0
    %158 = vperm.xlu0 %157, %v153
    %v159 = vpop.permute.xlu0 %158
    %vm160 = vcmp.eq.s32.totalorder %v156, 1
    %vm161 = vcmp.eq.s32.totalorder %v159, 1
    %v162 = vlaneseq
    %v163 = vshrl.u32 %v162, 7
    %v164 = vsub.s32 0, %v163
    %v165 = vrot.slane %v151, %v164
    %v166 = vsel %vm160, %v165, 0.0
    %v167 = vsel %vm161, %v165, 0.0
    %v168 = vadd.f32 %v147, %v166
    %v169 = vadd.f32 %v148, %v167
    %v170 = vand.u32 2147483647, %v61
    %vm171 = vcmp.le.f32.partialorder %v170, 0.7853982
    %vm172 = vcmp.lt.s32.totalorder %v61, 0
    %v173 = vand.u32 %v61, 2139095040
    %v174 = vshrl.u32 %v173, 23
    %v175 = vsub.s32 %v174, 127
    %v176 = vand.u32 2147483647, %v61
    %v177 = vand.u32 %v176, 8388607
    %v178 = vor.u32 %v177, 8388608
    %v179 = vsub.s32 0, %v178
    %v180 = vadd.s32 %v175, 1
    %vm181 = vcmp.gt.s32.totalorder %v180, 0
    %v182 = vsel %vm181, %v180, 0
    %v183 = vshrl.u32 %v182, 5
    %v184 = vand.u32 %v182, 31
    %v185 = vsub.s32 32, %v184
    %v186 = vshrl.u32 683565275, %v185
    %v187 = vshll.u32 683565275, %v184
    %v188 = vshrl.u32 2475754826, %v185
    %v189 = vor.u32 %v187, %v188
    %v190 = vshll.u32 2475754826, %v184
    %v191 = vshrl.u32 2131351028, %v185
    %v192 = vor.u32 %v190, %v191
    %v193 = vshll.u32 2131351028, %v184
    %v194 = vshrl.u32 2102212464, %v185
    %v195 = vor.u32 %v193, %v194
    %v196 = vshll.u32 2102212464, %v184
    %v197 = vshrl.u32 920167782, %v185
    %v198 = vor.u32 %v196, %v197
    %v199 = vshll.u32 920167782, %v184
    %v200 = vshrl.u32 1326507024, %v185
    %v201 = vor.u32 %v199, %v200
    %vm202 = vcmp.lt.s32.totalorder %v183, 1
    %vm203 = vcmp.lt.s32.totalorder %v183, 2
    %vm204 = vcmp.lt.s32.totalorder %v183, 3
    %vm205 = vcmp.lt.s32.totalorder %v183, 4
    %v206 = vsel %vm202, %v186, %v189
    %v207 = vsel %vm205, %v195, 2102212464
    %v208 = vsel %vm204, %v192, %v207
    %v209 = vsel %vm203, %v206, %v208
    %v210 = vsel %vm202, %v189, %v192
    %v211 = vsel %vm205, %v198, 920167782
    %v212 = vsel %vm204, %v195, %v211
    %v213 = vsel %vm203, %v210, %v212
    %v214 = vsel %vm202, %v192, %v195
    %v215 = vsel %vm205, %v201, 1326507024
    %v216 = vsel %vm204, %v198, %v215
    %v217 = vsel %vm203, %v214, %v216
    %v218 = vshll.u32 %v178, 8
    %v219 = vmul.u32.u64.compose %v218, %v217
    %v220 = vextract.low.u32 %v219
    %v221 = vextract.high.u32 %v219
    %v222 = vmul.u32.u64.compose %v218, %v213
    %v223 = vextract.low.u32 %v222
    %v224 = vextract.high.u32 %v222
    %v225 = vmul.u32 %v218, %v209
    %v226 = vadd.s32 %v221, %v223
    %vm227 = vc.u32 %v221, %v223
    %v228 = vadd.s32 %v224, 1
    %v229 = vsel %vm227, %v228, %v224
    %v230 = vadd.s32 %v225, %v229
    %v231 = vadd.s32 %v230, 536870912
    %v232 = vshrl.u32 %v231, 30
    %v233 = vshll.u32 %v232, 30
    %v234 = vsub.s32 %v230, %v233
    %vm235 = vcmp.lt.s32.totalorder %v234, 0
    %v236 = vsub.s32 0, %v234
    %v237 = vsel %vm235, %v236, %v234
    %v238 = vclz %v237
    %v239 = vsub.s32 %v238, 2
    %vm240 = vcmp.gt.s32.totalorder 0, %v239
    %v241 = vsel %vm240, 0, %v239
    %v242 = vsub.s32 32, %v241
    %v243 = vshll.u32 %v234, %v241
    %v244 = vshrl.u32 %v226, %v242
    %v245 = vor.u32 %v243, %v244
    %v246 = vsub.s32 4294967266, %v241
    %v247 = vadd.s32 %v246, 127
    %v248 = vshll.u32 %v247, 23
    %v249 = vor.u32 4788187, %v248
    %v250 = vand.u32 2147483647, %v249
    %v252 = vcvt.s32.f32 %v245
    %v253 = vmul.f32 %v252, %v250
    %v254 = vxor.u32 %v253, 2147483648
    %v255 = vsel %vm172, %v254, %v253
    %v256 = vsub.s32 4, %v232
    %v257 = vsel %vm172, %v256, %v232
    %v258 = vsel %vm171, %v61, %v255
    %v259 = vsel %vm171, 0, %v257
    %v260 = vcosq.f32.pop %v258
    %v261 = vsinq.f32.pop %v258
    %vm262 = vweird.f32 %v61
    %v263 = vadd.s32 %v259, 3
    %v264 = vand.u32 %v263, 3
    %vm265 = vcmp.lt.s32.totalorder %v264, 2
    %vm266 = vcmp.eq.s32.totalorder %v264, 0
    %v267 = vxor.u32 %v261, 2147483648
    %v268 = vsel %vm266, %v260, %v267
    %vm269 = vcmp.eq.s32.totalorder %v264, 2
    %v270 = vxor.u32 %v260, 2147483648
    %v271 = vsel %vm269, %v270, %v261
    %v272 = vsel %vm265, %v268, %v271
    %v273 = vsel %vm262, nan, %v272
    %v274 = vand.u32 2147483647, %v62
    %vm275 = vcmp.le.f32.partialorder %v274, 0.7853982
    %vm276 = vcmp.lt.s32.totalorder %v62, 0
    %v277 = vand.u32 %v62, 2139095040
    %v278 = vshrl.u32 %v277, 23
    %v279 = vsub.s32 %v278, 127
    %v280 = vand.u32 2147483647, %v62
    %v281 = vand.u32 %v280, 8388607
    %v282 = vor.u32 %v281, 8388608
    %v283 = vsub.s32 0, %v282
    %v284 = vadd.s32 %v279, 1
    %vm285 = vcmp.gt.s32.totalorder %v284, 0
    %v286 = vsel %vm285, %v284, 0
    %v287 = vshrl.u32 %v286, 5
    %v288 = vand.u32 %v286, 31
    %v289 = vsub.s32 32, %v288
    %v290 = vshrl.u32 683565275, %v289
    %v291 = vshll.u32 683565275, %v288
    %v292 = vshrl.u32 2475754826, %v289
    %v293 = vor.u32 %v291, %v292
    %v294 = vshll.u32 2475754826, %v288
    %v295 = vshrl.u32 2131351028, %v289
    %v296 = vor.u32 %v294, %v295
    %v297 = vshll.u32 2131351028, %v288
    %v298 = vshrl.u32 2102212464, %v289
    %v299 = vor.u32 %v297, %v298
    %v300 = vshll.u32 2102212464, %v288
    %v301 = vshrl.u32 920167782, %v289
    %v302 = vor.u32 %v300, %v301
    %v303 = vshll.u32 920167782, %v288
    %v304 = vshrl.u32 1326507024, %v289
    %v305 = vor.u32 %v303, %v304
    %vm306 = vcmp.lt.s32.totalorder %v287, 1
    %vm307 = vcmp.lt.s32.totalorder %v287, 2
    %vm308 = vcmp.lt.s32.totalorder %v287, 3
    %vm309 = vcmp.lt.s32.totalorder %v287, 4
    %v310 = vsel %vm306, %v290, %v293
    %v311 = vsel %vm309, %v299, 2102212464
    %v312 = vsel %vm308, %v296, %v311
    %v313 = vsel %vm307, %v310, %v312
    %v314 = vsel %vm306, %v293, %v296
    %v315 = vsel %vm309, %v302, 920167782
    %v316 = vsel %vm308, %v299, %v315
    %v317 = vsel %vm307, %v314, %v316
    %v318 = vsel %vm306, %v296, %v299
    %v319 = vsel %vm309, %v305, 1326507024
    %v320 = vsel %vm308, %v302, %v319
    %v321 = vsel %vm307, %v318, %v320
    %v322 = vshll.u32 %v282, 8
    %v323 = vmul.u32.u64.compose %v322, %v321
    %v324 = vextract.low.u32 %v323
    %v325 = vextract.high.u32 %v323
    %v326 = vmul.u32.u64.compose %v322, %v317
    %v327 = vextract.low.u32 %v326
    %v328 = vextract.high.u32 %v326
    %v329 = vmul.u32 %v322, %v313
    %v330 = vadd.s32 %v325, %v327
    %vm331 = vc.u32 %v325, %v327
    %v332 = vadd.s32 %v328, 1
    %v333 = vsel %vm331, %v332, %v328
    %v334 = vadd.s32 %v329, %v333
    %v335 = vadd.s32 %v334, 536870912
    %v336 = vshrl.u32 %v335, 30
    %v337 = vshll.u32 %v336, 30
    %v338 = vsub.s32 %v334, %v337
    %vm339 = vcmp.lt.s32.totalorder %v338, 0
    %v340 = vsub.s32 0, %v338
    %v341 = vsel %vm339, %v340, %v338
    %v342 = vclz %v341
    %v343 = vsub.s32 %v342, 2
    %vm344 = vcmp.gt.s32.totalorder 0, %v343
    %v345 = vsel %vm344, 0, %v343
    %v346 = vsub.s32 32, %v345
    %v347 = vshll.u32 %v338, %v345
    %v348 = vshrl.u32 %v330, %v346
    %v349 = vor.u32 %v347, %v348
    %v350 = vsub.s32 4294967266, %v345
    %v351 = vadd.s32 %v350, 127
    %v352 = vshll.u32 %v351, 23
    %v353 = vor.u32 4788187, %v352
    %v354 = vand.u32 2147483647, %v353
    %v356 = vcvt.s32.f32 %v349
    %v357 = vmul.f32 %v356, %v354
    %v358 = vxor.u32 %v357, 2147483648
    %v359 = vsel %vm276, %v358, %v357
    %v360 = vsub.s32 4, %v336
    %v361 = vsel %vm276, %v360, %v336
    %v362 = vsel %vm275, %v62, %v359
    %v363 = vsel %vm275, 0, %v361
    %v364 = vcosq.f32.pop %v362
    %v365 = vsinq.f32.pop %v362
    %vm366 = vweird.f32 %v62
    %v367 = vadd.s32 %v363, 3
    %v368 = vand.u32 %v367, 3
    %vm369 = vcmp.lt.s32.totalorder %v368, 2
    %vm370 = vcmp.eq.s32.totalorder %v368, 0
    %v371 = vxor.u32 %v365, 2147483648
    %v372 = vsel %vm370, %v364, %v371
    %vm373 = vcmp.eq.s32.totalorder %v368, 2
    %v374 = vxor.u32 %v364, 2147483648
    %v375 = vsel %vm373, %v374, %v365
    %v376 = vsel %vm369, %v372, %v375
    %v377 = vsel %vm366, nan, %v376
    %v378 = vsel %vm65, 1, 0
    %v379 = vsel %vm66, 1, 0
    %380 = vset.pattern.permute.xlu0 0
    %381 = vperm.xlu0 %380, %v378
    %v382 = vpop.permute.xlu0 %381
    %383 = vset.pattern.permute.xlu0 0
    %384 = vperm.xlu0 %383, %v379
    %v385 = vpop.permute.xlu0 %384
    %vm386 = vcmp.eq.s32.totalorder %v382, 1
    %vm387 = vcmp.eq.s32.totalorder %v385, 1
    %v388 = vsel %vm386, %v273, 0.0
    %v389 = vsel %vm387, %v377, 0.0
    %v390 = vand.u32 2147483647, %v61
    %vm391 = vcmp.le.f32.partialorder %v390, 0.7853982
    %vm392 = vcmp.lt.s32.totalorder %v61, 0
    %v393 = vand.u32 %v61, 2139095040
    %v394 = vshrl.u32 %v393, 23
    %v395 = vsub.s32 %v394, 127
    %v396 = vand.u32 2147483647, %v61
    %v397 = vand.u32 %v396, 8388607
    %v398 = vor.u32 %v397, 8388608
    %v399 = vsub.s32 0, %v398
    %v400 = vadd.s32 %v395, 1
    %vm401 = vcmp.gt.s32.totalorder %v400, 0
    %v402 = vsel %vm401, %v400, 0
    %v403 = vshrl.u32 %v402, 5
    %v404 = vand.u32 %v402, 31
    %v405 = vsub.s32 32, %v404
    %v406 = vshrl.u32 683565275, %v405
    %v407 = vshll.u32 683565275, %v404
    %v408 = vshrl.u32 2475754826, %v405
    %v409 = vor.u32 %v407, %v408
    %v410 = vshll.u32 2475754826, %v404
    %v411 = vshrl.u32 2131351028, %v405
    %v412 = vor.u32 %v410, %v411
    %v413 = vshll.u32 2131351028, %v404
    %v414 = vshrl.u32 2102212464, %v405
    %v415 = vor.u32 %v413, %v414
    %v416 = vshll.u32 2102212464, %v404
    %v417 = vshrl.u32 920167782, %v405
    %v418 = vor.u32 %v416, %v417
    %v419 = vshll.u32 920167782, %v404
    %v420 = vshrl.u32 1326507024, %v405
    %v421 = vor.u32 %v419, %v420
    %vm422 = vcmp.lt.s32.totalorder %v403, 1
    %vm423 = vcmp.lt.s32.totalorder %v403, 2
    %vm424 = vcmp.lt.s32.totalorder %v403, 3
    %vm425 = vcmp.lt.s32.totalorder %v403, 4
    %v426 = vsel %vm422, %v406, %v409
    %v427 = vsel %vm425, %v415, 2102212464
    %v428 = vsel %vm424, %v412, %v427
    %v429 = vsel %vm423, %v426, %v428
    %v430 = vsel %vm422, %v409, %v412
    %v431 = vsel %vm425, %v418, 920167782
    %v432 = vsel %vm424, %v415, %v431
    %v433 = vsel %vm423, %v430, %v432
    %v434 = vsel %vm422, %v412, %v415
    %v435 = vsel %vm425, %v421, 1326507024
    %v436 = vsel %vm424, %v418, %v435
    %v437 = vsel %vm423, %v434, %v436
    %v438 = vshll.u32 %v398, 8
    %v439 = vmul.u32.u64.compose %v438, %v437
    %v440 = vextract.low.u32 %v439
    %v441 = vextract.high.u32 %v439
    %v442 = vmul.u32.u64.compose %v438, %v433
    %v443 = vextract.low.u32 %v442
    %v444 = vextract.high.u32 %v442
    %v445 = vmul.u32 %v438, %v429
    %v446 = vadd.s32 %v441, %v443
    %vm447 = vc.u32 %v441, %v443
    %v448 = vadd.s32 %v444, 1
    %v449 = vsel %vm447, %v448, %v444
    %v450 = vadd.s32 %v445, %v449
    %v451 = vadd.s32 %v450, 536870912
    %v452 = vshrl.u32 %v451, 30
    %v453 = vshll.u32 %v452, 30
    %v454 = vsub.s32 %v450, %v453
    %vm455 = vcmp.lt.s32.totalorder %v454, 0
    %v456 = vsub.s32 0, %v454
    %v457 = vsel %vm455, %v456, %v454
    %v458 = vclz %v457
    %v459 = vsub.s32 %v458, 2
    %vm460 = vcmp.gt.s32.totalorder 0, %v459
    %v461 = vsel %vm460, 0, %v459
    %v462 = vsub.s32 32, %v461
    %v463 = vshll.u32 %v454, %v461
    %v464 = vshrl.u32 %v446, %v462
    %v465 = vor.u32 %v463, %v464
    %v466 = vsub.s32 4294967266, %v461
    %v467 = vadd.s32 %v466, 127
    %v468 = vshll.u32 %v467, 23
    %v469 = vor.u32 4788187, %v468
    %v470 = vand.u32 2147483647, %v469
    %v472 = vcvt.s32.f32 %v465
    %v473 = vmul.f32 %v472, %v470
    %v474 = vxor.u32 %v473, 2147483648
    %v475 = vsel %vm392, %v474, %v473
    %v476 = vsub.s32 4, %v452
    %v477 = vsel %vm392, %v476, %v452
    %v478 = vsel %vm391, %v61, %v475
    %v479 = vsel %vm391, 0, %v477
    %v480 = vcosq.f32.pop %v478
    %v481 = vsinq.f32.pop %v478
    %vm482 = vweird.f32 %v61
    %v483 = vand.u32 %v479, 3
    %vm484 = vcmp.lt.s32.totalorder %v483, 2
    %vm485 = vcmp.eq.s32.totalorder %v483, 0
    %v486 = vxor.u32 %v481, 2147483648
    %v487 = vsel %vm485, %v480, %v486
    %vm488 = vcmp.eq.s32.totalorder %v483, 2
    %v489 = vxor.u32 %v480, 2147483648
    %v490 = vsel %vm488, %v489, %v481
    %v491 = vsel %vm484, %v487, %v490
    %v492 = vsel %vm482, nan, %v491
    %v493 = vand.u32 2147483647, %v62
    %vm494 = vcmp.le.f32.partialorder %v493, 0.7853982
    %vm495 = vcmp.lt.s32.totalorder %v62, 0
    %v496 = vand.u32 %v62, 2139095040
    %v497 = vshrl.u32 %v496, 23
    %v498 = vsub.s32 %v497, 127
    %v499 = vand.u32 2147483647, %v62
    %v500 = vand.u32 %v499, 8388607
    %v501 = vor.u32 %v500, 8388608
    %v502 = vsub.s32 0, %v501
    %v503 = vadd.s32 %v498, 1
    %vm504 = vcmp.gt.s32.totalorder %v503, 0
    %v505 = vsel %vm504, %v503, 0
    %v506 = vshrl.u32 %v505, 5
    %v507 = vand.u32 %v505, 31
    %v508 = vsub.s32 32, %v507
    %v509 = vshrl.u32 683565275, %v508
    %v510 = vshll.u32 683565275, %v507
    %v511 = vshrl.u32 2475754826, %v508
    %v512 = vor.u32 %v510, %v511
    %v513 = vshll.u32 2475754826, %v507
    %v514 = vshrl.u32 2131351028, %v508
    %v515 = vor.u32 %v513, %v514
    %v516 = vshll.u32 2131351028, %v507
    %v517 = vshrl.u32 2102212464, %v508
    %v518 = vor.u32 %v516, %v517
    %v519 = vshll.u32 2102212464, %v507
    %v520 = vshrl.u32 920167782, %v508
    %v521 = vor.u32 %v519, %v520
    %v522 = vshll.u32 920167782, %v507
    %v523 = vshrl.u32 1326507024, %v508
    %v524 = vor.u32 %v522, %v523
    %vm525 = vcmp.lt.s32.totalorder %v506, 1
    %vm526 = vcmp.lt.s32.totalorder %v506, 2
    %vm527 = vcmp.lt.s32.totalorder %v506, 3
    %vm528 = vcmp.lt.s32.totalorder %v506, 4
    %v529 = vsel %vm525, %v509, %v512
    %v530 = vsel %vm528, %v518, 2102212464
    %v531 = vsel %vm527, %v515, %v530
    %v532 = vsel %vm526, %v529, %v531
    %v533 = vsel %vm525, %v512, %v515
    %v534 = vsel %vm528, %v521, 920167782
    %v535 = vsel %vm527, %v518, %v534
    %v536 = vsel %vm526, %v533, %v535
    %v537 = vsel %vm525, %v515, %v518
    %v538 = vsel %vm528, %v524, 1326507024
    %v539 = vsel %vm527, %v521, %v538
    %v540 = vsel %vm526, %v537, %v539
    %v541 = vshll.u32 %v501, 8
    %v542 = vmul.u32.u64.compose %v541, %v540
    %v543 = vextract.low.u32 %v542
    %v544 = vextract.high.u32 %v542
    %v545 = vmul.u32.u64.compose %v541, %v536
    %v546 = vextract.low.u32 %v545
    %v547 = vextract.high.u32 %v545
    %v548 = vmul.u32 %v541, %v532
    %v549 = vadd.s32 %v544, %v546
    %vm550 = vc.u32 %v544, %v546
    %v551 = vadd.s32 %v547, 1
    %v552 = vsel %vm550, %v551, %v547
    %v553 = vadd.s32 %v548, %v552
    %v554 = vadd.s32 %v553, 536870912
    %v555 = vshrl.u32 %v554, 30
    %v556 = vshll.u32 %v555, 30
    %v557 = vsub.s32 %v553, %v556
    %vm558 = vcmp.lt.s32.totalorder %v557, 0
    %v559 = vsub.s32 0, %v557
    %v560 = vsel %vm558, %v559, %v557
    %v561 = vclz %v560
    %v562 = vsub.s32 %v561, 2
    %vm563 = vcmp.gt.s32.totalorder 0, %v562
    %v564 = vsel %vm563, 0, %v562
    %v565 = vsub.s32 32, %v564
    %v566 = vshll.u32 %v557, %v564
    %v567 = vshrl.u32 %v549, %v565
    %v568 = vor.u32 %v566, %v567
    %v569 = vsub.s32 4294967266, %v564
    %v570 = vadd.s32 %v569, 127
    %v571 = vshll.u32 %v570, 23
    %v572 = vor.u32 4788187, %v571
    %v573 = vand.u32 2147483647, %v572
    %v575 = vcvt.s32.f32 %v568
    %v576 = vmul.f32 %v575, %v573
    %v577 = vxor.u32 %v576, 2147483648
    %v578 = vsel %vm495, %v577, %v576
    %v579 = vsub.s32 4, %v555
    %v580 = vsel %vm495, %v579, %v555
    %v581 = vsel %vm494, %v62, %v578
    %v582 = vsel %vm494, 0, %v580
    %v583 = vcosq.f32.pop %v581
    %v584 = vsinq.f32.pop %v581
    %vm585 = vweird.f32 %v62
    %v586 = vand.u32 %v582, 3
    %vm587 = vcmp.lt.s32.totalorder %v586, 2
    %vm588 = vcmp.eq.s32.totalorder %v586, 0
    %v589 = vxor.u32 %v584, 2147483648
    %v590 = vsel %vm588, %v583, %v589
    %vm591 = vcmp.eq.s32.totalorder %v586, 2
    %v592 = vxor.u32 %v583, 2147483648
    %v593 = vsel %vm591, %v592, %v584
    %v594 = vsel %vm587, %v590, %v593
    %v595 = vsel %vm585, nan, %v594
    %v596 = vsel %vm386, %v492, 0.0
    %v597 = vsel %vm387, %v595, 0.0
    %v598 = vadd.f32 %v388, %v168
    %v599 = vadd.f32 %v389, %v169
    %vm600 = vcmask 130048
    %601 = vst.msk [vmem:[#allocation2] sm:$0xff] %vm600, %v598
    %vm602 = vcmask 123904
    %603 = vst.msk [vmem:[#allocation2 + $0x8] sm:$0x3] %vm602, %v599
    %606 = vrot.lane.b32.xlu0 %v168, 112
    %v607 = vpop.permute.xlu0 %606
    %608 = vrot.lane.b32.xlu0 %v169, 112
    %v609 = vpop.permute.xlu0 %608
    %v612 = vadd.f32 %v596, %v607
    %v613 = vadd.f32 %v597, %v609
    %616 = vrot.lane.b32.xlu0 %v612, 16
    %v617 = vpop.permute.xlu0 %616
    %618 = vrot.lane.b32.xlu0 %v613, 16
    %v619 = vpop.permute.xlu0 %618
    %vm622 = vcmask 261248
    %623 = vst.msk [vmem:[#allocation2] sm:$0xff] %vm622, %v617
    %vm624 = vcmask 255104
    %625 = vst.msk [vmem:[#allocation2 + $0x8] sm:$0x3] %vm624, %v619
    // Predicated region
    $region18: #{tpu_custom_call.1} parent=1 // pred_check
      _
    $region19: #{tpu_custom_call.1} parent=1 // pred_check_branch
      %627 = sbr.rel (0) target = $region21
    $region20: #{tpu_custom_call.1} parent=1 // pred_region
      %s629 = ssub.s32 256, 256
      %630 = vsyncadd [#allocation3], %s629
      %s631 = sshll.u32 [#allocation2], 4
      %s632 = int_to_ptr.vmem [resolvable:$true] %s631
      %637 = dma.vmem_to_hbm [thread:$0]  %s632, 256, %s4, [#allocation3], 128, 128, 8
    $region21: #{tpu_custom_call.1} parent=1 // pred_fallthru
      _
    // Predicated region
    $region22: #{tpu_custom_call.1} parent=1 // pred_check
      _
    $region23: #{tpu_custom_call.1} parent=1 // pred_check_branch
      %639 = sbr.rel (0) target = $region25
    $region24: #{tpu_custom_call.1} parent=1 // pred_region
      %640 = dma.done [#allocation3], 256
    $region25: #{tpu_custom_call.1} parent=1 // pred_fallthru
      _
    %641 = vsyncpa [#allocation3], 1

</llo_original>
